<compile_context>
chip_gen: v7x
topology: tpu7x:2x2x1
jax: 0.10.0
libtpu: 0.0.40
codegen_flags: <defaults>
</compile_context>

<pallas_src>
import jax
import jax.numpy as jnp
from jax.experimental import pallas as pl
from jax.experimental.pallas import tpu as pltpu


def _round_up(n, m):
    return ((n + m - 1) // m) * m


def _proj_kernel_folded(x_ref, w_ref, o_ref):
    # x_ref: (Cin_p, TL)  w_ref: (Cout_p, Cin_p)  o_ref: (Cout_p, TL)
    o_ref[...] = jnp.dot(
        w_ref[...], x_ref[...], preferred_element_type=jnp.float32
    ).astype(o_ref.dtype)


def _proj_kernel_batched(x_ref, w_ref, o_ref):
    # x_ref: (1, Cin_p, TL)  w_ref: (Cout_p, Cin_p)  o_ref: (1, Cout_p, TL)
    o_ref[0] = jnp.dot(
        w_ref[...], x_ref[0], preferred_element_type=jnp.float32
    ).astype(o_ref.dtype)


def linear_projection(x, w, *, compute_dtype=None, out_dtype=None, tl_max=1024):
    """Pointwise Conv1d (kernel_size=1, bias=False) as a Pallas TPU kernel.

    Args:
      x: (B, C_in, L) input, NCL layout (PyTorch Conv1d convention).
      w: (C_out, C_in) projection weight (conv weight with kernel axis squeezed).
      compute_dtype: dtype used for the matmul operand streams (default: x.dtype).
          Pass jnp.bfloat16 to halve HBM traffic; accumulation stays f32.
      out_dtype: output dtype (default: x.dtype).
      tl_max: max length-tile width (multiple of 128).

    Returns:
      (B, C_out, L) output.
    """
    B, C_in, L = x.shape
    C_out, C_in_w = w.shape
    assert C_in_w == C_in, "weight / input channel mismatch"

    out_dtype = out_dtype if out_dtype is not None else x.dtype
    cdt = jnp.dtype(compute_dtype if compute_dtype is not None else x.dtype)
    itemsize = cdt.itemsize
    # Sublane quantum: f32 -> 8, bf16 -> 16, int8/fp8 -> 32.
    sub = 8 * max(1, 4 // itemsize)

    xb = x.astype(cdt)
    wb = w.astype(cdt)

    # Zero-pad channel axes to the sublane quantum (numerically a no-op).
    cin_p = _round_up(C_in, sub)
    cout_p = _round_up(C_out, sub)
    if (cout_p, cin_p) != (C_out, C_in):
        wb = jnp.pad(wb, ((0, cout_p - C_out), (0, cin_p - C_in)))

    # Safe on v5e/v6e (128 MiB physical) and under v7x's 64 MiB.
    vmem_limit = 32 * 1024 * 1024

    if L < 128:
        # --- Small-length regime: fold batch onto the lane axis. ---
        # Output becomes a lane-dense (C_out, B*L) slab -> unmasked stores,
        # single (or few) grid steps instead of B tiny ones.
        BL = B * L
        TL = min(_round_up(tl_max, 128), _round_up(BL, 128))
        bl_p = _round_up(BL, TL)
        xf = jnp.transpose(xb, (1, 0, 2)).reshape(C_in, BL)
        xf = jnp.pad(xf, ((0, cin_p - C_in), (0, bl_p - BL)))

        y = pl.pallas_call(
            _proj_kernel_folded,
            out_shape=jax.ShapeDtypeStruct((cout_p, bl_p), out_dtype),
            grid_spec=pltpu.PrefetchScalarGridSpec(
                num_scalar_prefetch=0,
                grid=(bl_p // TL,),
                in_specs=[
                    pl.BlockSpec((cin_p, TL), lambda l: (0, l)),
                    pl.BlockSpec((cout_p, cin_p), lambda l: (0, 0)),
                ],
                out_specs=pl.BlockSpec((cout_p, TL), lambda l: (0, l)),
            ),
            compiler_params=pltpu.CompilerParams(
                dimension_semantics=("parallel",),
                vmem_limit_bytes=vmem_limit,
            ),
        )(xf, wb)
        y = y[:C_out, :BL].reshape(C_out, B, L)
        return jnp.transpose(y, (1, 0, 2))

    # --- General regime: tile the length axis, keep weight VMEM-resident. ---
    TL = min(_round_up(tl_max, 128), _round_up(L, 128))

    def _footprint(tl):
        # double-buffered x and out tiles + double-buffered weight
        return (2 * (cin_p + cout_p) * tl + 2 * cout_p * cin_p) * itemsize

    while TL > 128 and _footprint(TL) > 24 * 1024 * 1024:
        TL -= 128

    l_p = _round_up(L, TL)
    if cin_p != C_in or l_p != L:
        xb = jnp.pad(xb, ((0, 0), (0, cin_p - C_in), (0, l_p - L)))

    y = pl.pallas_call(
        _proj_kernel_batched,
        out_shape=jax.ShapeDtypeStruct((B, cout_p, l_p), out_dtype),
        grid_spec=pltpu.PrefetchScalarGridSpec(
            num_scalar_prefetch=0,
            grid=(B, l_p // TL),
            in_specs=[
                pl.BlockSpec((1, cin_p, TL), lambda b, l: (b, 0, l)),
                pl.BlockSpec((cout_p, cin_p), lambda b, l: (0, 0)),
            ],
            out_specs=pl.BlockSpec((1, cout_p, TL), lambda b, l: (b, 0, l)),
        ),
        compiler_params=pltpu.CompilerParams(
            dimension_semantics=("parallel", "parallel"),
            vmem_limit_bytes=vmem_limit,
        ),
    )(xb, wb)
    return y[:, :C_out, :L]


if __name__ == "__main__":
    # Shapes consistent with the module's forward: batch=2, in_channels=4
    # (inferred lazily by LazyConv1d), length=16, out_features=32.
    B, C_in, L, C_out = 2, 4, 16, 32

    key = jax.random.PRNGKey(0)
    kx, kw, kx2 = jax.random.split(key, 3)
    x = jax.random.normal(kx, (B, C_in, L), dtype=jnp.float32)
    # PyTorch-like kaiming-uniform bound for a size-1 conv: 1/sqrt(C_in * 1).
    bound = 1.0 / jnp.sqrt(jnp.float32(C_in))
    w = jax.random.uniform(kw, (C_out, C_in), dtype=jnp.float32,
                           minval=-bound, maxval=bound)

    # 1) Demo small-L shape -> folded lane-dense path, f32 compute.
    y = jax.block_until_ready(linear_projection(x, w))
    y_ref = jnp.einsum("oc,bcl->bol", w, x)
    assert y.shape == (B, C_out, L)
    assert jnp.allclose(y, y_ref, atol=1e-5, rtol=1e-5)

    # 2) Same shape with bf16 operand streams (halved HBM bytes, f32 accumulation).
    y_bf = jax.block_until_ready(
        linear_projection(x, w, compute_dtype=jnp.bfloat16))
    assert y_bf.shape == (B, C_out, L)
    assert jnp.allclose(y_bf, y_ref, atol=5e-2, rtol=5e-2)

    # 3) Longer, non-128-multiple sequence -> batched L-tiled path
    #    (grid=(B, L_tiles), both axes parallel; pad/slice tail tile).
    L2 = 300
    x2 = jax.random.normal(kx2, (B, C_in, L2), dtype=jnp.float32)
    y2 = jax.block_until_ready(linear_projection(x2, w))
    y2_ref = jnp.einsum("oc,bcl->bol", w, x2)
    assert y2.shape == (B, C_out, L2)
    assert jnp.allclose(y2, y2_ref, atol=1e-5, rtol=1e-5)

    print("KERNEL_OK")
</pallas_src>

<mosaic_0001>
module attributes {stable_mosaic.version = 11 : i64} {
  func.func @_proj_kernel_folded(%arg0: i32, %arg1: memref<8x128xf32, #tpu.memory_space<vmem>>, %arg2: memref<32x8xf32, #tpu.memory_space<vmem>>, %arg3: memref<32x128xf32, #tpu.memory_space<vmem>>) attributes {dimension_semantics = [#tpu.dimension_semantics<parallel>], iteration_bounds = array<i64: 1>, scalar_prefetch = 0 : i64, scratch_operands = 0 : i64, tpu.core_type = #tpu.core_type<tc>, window_params = [{transform_indices = @transform_0, window_bounds = array<i64: 8, 128>}, {pipeline_mode = #tpu.pipeline_mode<synchronous>, transform_indices = @transform_1, window_bounds = array<i64: 32, 8>}, {transform_indices = @transform_2, window_bounds = array<i64: 32, 128>}]} {
    %c0 = arith.constant 0 : index
    %c0_0 = arith.constant 0 : index
    %0 = vector.load %arg2[%c0, %c0_0] : memref<32x8xf32, #tpu.memory_space<vmem>>, vector<32x8xf32>
    %c0_1 = arith.constant 0 : index
    %c0_2 = arith.constant 0 : index
    %1 = vector.load %arg1[%c0_1, %c0_2] : memref<8x128xf32, #tpu.memory_space<vmem>>, vector<8x128xf32>
    %cst = arith.constant dense<0.000000e+00> : vector<32x128xf32>
    %2 = tpu.matmul %0, %1, %cst {dimension_numbers = #tpu.dot_dimension_numbers<[1], [0], [0], [1], [0, 0, 1, 1], [], []>} : vector<32x8xf32>, vector<8x128xf32>, vector<32x128xf32> -> vector<32x128xf32>
    %c0_3 = arith.constant 0 : index
    %c0_4 = arith.constant 0 : index
    %3 = vector.load %arg3[%c0_3, %c0_4] : memref<32x128xf32, #tpu.memory_space<vmem>>, vector<32x128xf32>
    tpu.vector_store %arg3[%c0_3, %c0_4], %2 {strides = array<i32>} : memref<32x128xf32, #tpu.memory_space<vmem>>, vector<32x128xf32>,
    return
  }
  func.func @transform_0(%arg0: i32) -> (i32, i32) {
    %c0_i32 = arith.constant 0 : i32
    %c0_i32_0 = arith.constant 0 : i32
    return %c0_i32, %arg0 : i32, i32
  }
  func.func @transform_1(%arg0: i32) -> (i32, i32) {
    %c0_i32 = arith.constant 0 : i32
    %c0_i32_0 = arith.constant 0 : i32
    %c0_i32_1 = arith.constant 0 : i32
    return %c0_i32, %c0_i32_0 : i32, i32
  }
  func.func @transform_2(%arg0: i32) -> (i32, i32) {
    %c0_i32 = arith.constant 0 : i32
    %c0_i32_0 = arith.constant 0 : i32
    return %c0_i32, %arg0 : i32, i32
  }
}

</mosaic_0001>

<llo_original>
// kernel: tpu_custom_call.1
$region0: #{tpu_custom_call.1}
  #allocation0 [shape = 'u32[]', space=smem, size = 0x4, offset = 0x4, fixed_abs, tag = 'smem constant byte address 0x4 - core index']
  #allocation1 [shape = 'u32[144,128]{1,0:T(1,128)}', space=vmem, size = 0x12000, scoped, tag = 'internal scratch']
  %s0 = inlined_call_operand.vmem [shape: f32[8,128], index: 0, kind: input, shape index: {}]
  %s1 = inlined_call_operand.vmem [shape: f32[32,8], index: 1, kind: input, shape index: {}]
  %s2 = inlined_call_operand.hbm [shape: f32[32,128], index: 2, kind: output, shape index: {}]
  %s3 = sld [smem:[#allocation0]]
  $region18: #{tpu_custom_call.1} parent=0
    _
  %s5 = ssub.s32 1, %s3
  %s6 = scalar_select 0, %s5, %s3
  $region1: #{tpu_custom_call.1} parent=0
    #allocation2 [shape = 'u8[16384]{0}', space=vmem, size = 0x4000, scoped, tag = 'output window, operand 0, single buffered']
    #allocation3 [shape = 's32[1]{0}', space=sflag, size = 0x4, scoped, tag = 'scoped memory for tpu_custom_call.1']
    %7 = vsyncpa [#allocation3], 0
    // Predicated region
    $region2: #{tpu_custom_call.1} parent=1 // pred_check
      _
    $region3: #{tpu_custom_call.1} parent=1 // pred_check_branch
      %9 = sbr.rel (0) target = $region5
    $region4: #{tpu_custom_call.1} parent=1 // pred_region
      _
    $region5: #{tpu_custom_call.1} parent=1 // pred_fallthru
      _
    // Predicated region
    $region6: #{tpu_custom_call.1} parent=1 // pred_check
      _
    $region7: #{tpu_custom_call.1} parent=1 // pred_check_branch
      %11 = sbr.rel (0) target = $region9
    $region8: #{tpu_custom_call.1} parent=1 // pred_region
      _
    $region9: #{tpu_custom_call.1} parent=1 // pred_fallthru
      _
    %v12 = vld [vmem:[%s1] sm:$0xff]
    %v13 = vld [vmem:[%s1 + $0x8] sm:$0xff]
    %v14 = vld [vmem:[%s1 + $0x10] sm:$0xff]
    %v15 = vld [vmem:[%s1 + $0x18] sm:$0xff]
    %v16 = vld [vmem:[%s0] sm:$0xff]
    %vm17 = vcmask 64512
    %v19 = vsel %vm17, %v12, 0
    %v22 = vsel %vm17, %v13, 0
    %v25 = vsel %vm17, %v14, 0
    %v28 = vsel %vm17, %v15, 0
    %30 = vmatprep.subr.mxu0 0.0
    %31 = vmatpush1.msra.mxu0 %v16
    %32 = vmatprep.subr.mxu0 0.0
    %33 = vmatpush1.msra.mxu0 0.0
    %34 = vmatprep.subr.mxu0 0.0
    %35 = vmatpush1.msra.mxu0 0.0
    %36 = vmatprep.subr.mxu0 0.0
    %37 = vmatpush1.msra.mxu0 0.0
    %38 = vmatprep.subr.mxu0 0.0
    %39 = vmatpush1.msra.mxu0 0.0
    %40 = vmatprep.subr.mxu0 0.0
    %41 = vmatpush1.msra.mxu0 0.0
    %42 = vmatprep.subr.mxu0 0.0
    %43 = vmatpush1.msra.mxu0 0.0
    %44 = vmatprep.subr.mxu0 0.0
    %45 = vmatpush1.msra.mxu0 0.0
    %46 = vmatprep.subr.mxu0 0.0
    %47 = vmatpush1.msra.mxu0 0.0
    %48 = vmatprep.subr.mxu0 0.0
    %49 = vmatpush1.msra.mxu0 0.0
    %50 = vmatprep.subr.mxu0 0.0
    %51 = vmatpush1.msra.mxu0 0.0
    %52 = vmatprep.subr.mxu0 0.0
    %53 = vmatpush1.msra.mxu0 0.0
    %54 = vmatprep.subr.mxu0 0.0
    %55 = vmatpush1.msra.mxu0 0.0
    %56 = vmatprep.subr.mxu0 0.0
    %57 = vmatpush1.msra.mxu0 0.0
    %58 = vmatprep.subr.mxu0 0.0
    %59 = vmatpush1.msra.mxu0 0.0
    %60 = vmatprep.subr.mxu0 0.0
    %61 = vmatpush1.msra.mxu0 0.0
    %62 = vmatprep.subr.mxu0 0.0
    %63 = vmatpush1.msra.mxu0 0.0
    %64 = vmatprep.subr.mxu0 0.0
    %65 = vmatpush1.msra.mxu0 0.0
    %66 = vmatprep.subr.mxu0 0.0
    %67 = vmatpush1.msra.mxu0 0.0
    %68 = vmatprep.subr.mxu0 0.0
    %69 = vmatpush1.msra.mxu0 0.0
    %70 = vmatprep.subr.mxu0 0.0
    %71 = vmatpush1.msra.mxu0 0.0
    %72 = vmatprep.subr.mxu0 0.0
    %73 = vmatpush1.msra.mxu0 0.0
    %74 = vmatprep.subr.mxu0 0.0
    %75 = vmatpush1.msra.mxu0 0.0
    %76 = vmatprep.subr.mxu0 0.0
    %77 = vmatpush1.msra.mxu0 0.0
    %78 = vmatprep.subr.mxu0 0.0
    %79 = vmatpush1.msra.mxu0 0.0
    %80 = vmatprep.subr.mxu0 0.0
    %81 = vmatpush1.msra.mxu0 0.0
    %82 = vmatprep.subr.mxu0 0.0
    %83 = vmatpush1.msra.mxu0 0.0
    %84 = vmatprep.subr.mxu0 0.0
    %85 = vmatpush1.msra.mxu0 0.0
    %86 = vmatprep.subr.mxu0 0.0
    %87 = vmatpush1.msra.mxu0 0.0
    %88 = vmatprep.subr.mxu0 0.0
    %89 = vmatpush1.msra.mxu0 0.0
    %90 = vmatprep.subr.mxu0 0.0
    %91 = vmatpush1.msra.mxu0 0.0
    %92 = vmatprep.subr.mxu0 0.0
    %93 = vmatpush1.msra.mxu0 0.0
    %94 = vmatprep.mubr.f32.mxu0 0.0
    %95 = vmatmul.mubr.f32.gmra.mrb[0].mxu0 %v19
    %v96 = vpop.f32.mrb[0].mxu0
    %v97 = vadd.f32 0.0, %v96
    %v98 = vpop.f32.mrb[0].mxu0
    %99 = vmatprep.mubr.f32.mxu0 0.0
    %100 = vmatmul.mubr.f32.gmra.mrb[0].mxu0 %v22
    %v101 = vpop.f32.mrb[0].mxu0
    %v102 = vadd.f32 0.0, %v101
    %v103 = vpop.f32.mrb[0].mxu0
    %104 = vmatprep.mubr.f32.mxu0 0.0
    %105 = vmatmul.mubr.f32.gmra.mrb[0].mxu0 %v25
    %v106 = vpop.f32.mrb[0].mxu0
    %v107 = vadd.f32 0.0, %v106
    %v108 = vpop.f32.mrb[0].mxu0
    %109 = vmatprep.mubr.f32.mxu0 0.0
    %110 = vmatmul.mubr.f32.gmra.mrb[0].mxu0 %v28
    %v111 = vpop.f32.mrb[0].mxu0
    %v112 = vadd.f32 0.0, %v111
    %v113 = vpop.f32.mrb[0].mxu0
    %114 = vdwg.mxu0
    %115 = vst [vmem:[#allocation2] sm:$0xff] %v97
    %116 = vst [vmem:[#allocation2 + $0x8] sm:$0xff] %v102
    %117 = vst [vmem:[#allocation2 + $0x10] sm:$0xff] %v107
    %118 = vst [vmem:[#allocation2 + $0x18] sm:$0xff] %v112
    // Predicated region
    $region10: #{tpu_custom_call.1} parent=1 // pred_check
      _
    $region11: #{tpu_custom_call.1} parent=1 // pred_check_branch
      %120 = sbr.rel (0) target = $region13
    $region12: #{tpu_custom_call.1} parent=1 // pred_region
      %s122 = ssub.s32 512, 512
      %123 = vsyncadd [#allocation3], %s122
      %s124 = sshll.u32 [#allocation2], 4
      %s125 = int_to_ptr.vmem [resolvable:$true] %s124
      %130 = dma.vmem_to_hbm [thread:$0]  %s125, 512, %s2, [#allocation3], 128, 128, 8
    $region13: #{tpu_custom_call.1} parent=1 // pred_fallthru
      _
    // Predicated region
    $region14: #{tpu_custom_call.1} parent=1 // pred_check
      _
    $region15: #{tpu_custom_call.1} parent=1 // pred_check_branch
      %132 = sbr.rel (0) target = $region17
    $region16: #{tpu_custom_call.1} parent=1 // pred_region
      %133 = dma.done [#allocation3], 512
    $region17: #{tpu_custom_call.1} parent=1 // pred_fallthru
      _
    %134 = vsyncpa [#allocation3], 1

</llo_original>
